<compile_context>
chip_gen: v6e
topology: v6e:2x2x1
jax: 0.10.0
libtpu: 0.0.40
codegen_flags: <defaults>
</compile_context>

<pallas_src>
import functools
import math

import numpy as np
import jax
import jax.numpy as jnp
from jax import lax
from jax.scipy.linalg import expm
from jax.experimental import pallas as pl
from jax.experimental.pallas import tpu as pltpu

EXPM_TAYLOR_ORDER = 12
_INV_FACT = tuple(1.0 / math.factorial(k) for k in range(EXPM_TAYLOR_ORDER + 1))


# ----------------------------- parameter setup (plain NumPy glue) -----------

def _fock_basis(n, m):
    """All occupation tuples (n1,...,nm) with sum n, lexicographic order."""
    states = []

    def rec(prefix, remaining, slots):
        if slots == 1:
            states.append(prefix + (remaining,))
            return
        for k in range(remaining + 1):
            rec(prefix + (k,), remaining - k, slots - 1)

    rec((), n, m)
    return states


def fock_bs_hamiltonian(n, m, m1, m2):
    """n-photon Fock-space lift of the single-photon BS Hamiltonian
    (h[m1,m2] = -1, h[m2,m1] = +1), i.e. dGamma(h) = -a_m1^† a_m2 + a_m2^† a_m1."""
    basis = _fock_basis(n, m)
    index = {s: i for i, s in enumerate(basis)}
    d = len(basis)
    H = np.zeros((d, d), dtype=np.float64)
    for (j, k, coeff) in ((m1, m2, -1.0), (m2, m1, +1.0)):
        for col, s in enumerate(basis):
            if s[k] == 0:
                continue
            t = list(s)
            amp = np.sqrt(t[k]); t[k] -= 1
            amp *= np.sqrt(t[j] + 1); t[j] += 1
            H[index[tuple(t)], col] += coeff * amp
    return H.astype(np.float32)


# ----------------------------- fused Pallas kernel ---------------------------

def _vqc_kernel(ang_ref, h_ref, rho_in_ref, out_ref, *, scale_log2):
    """One grid step == one gate: U_g = expm(-(theta_g) H_g); rho <- U_g rho U_g^T.

    ang_ref   : (G,)        SMEM (scalar prefetch), gate angles
    h_ref     : (1, dr, dr) VMEM, this gate's (zero-padded) Hamiltonian
    rho_in_ref: (dr, dr)    VMEM, initial density matrix (used only at step 0)
    out_ref   : (dr, dr)    VMEM, revisited output block == rho accumulator
    """
    g = pl.program_id(0)

    @pl.when(g == 0)
    def _():                                   # seed the accumulator once
        out_ref[...] = rho_in_ref[...]

    dr = h_ref.shape[-1]

    # A = -(theta_g / 2^s) * H_g : scale folded into one in-kernel VPU multiply.
    theta = ang_ref[g]
    A = (-theta * (1.0 / float(1 << scale_log2))) * h_ref[0]

    # Identity built in-kernel (no extra input / DMA / broadcast temporary).
    row = lax.broadcasted_iota(jnp.int32, (dr, dr), 0)
    col = lax.broadcasted_iota(jnp.int32, (dr, dr), 1)
    eye = (row == col).astype(jnp.float32)

    def mm(x, y):
        return jnp.dot(x, y, preferred_element_type=jnp.float32)

    c = _INV_FACT
    A2 = mm(A, A)
    A4 = mm(A2, A2)
    A6 = mm(A2, A4)

    # Degree-12 Taylor via Paterson-Stockmeyer: 6 matmuls total.
    even = (c[0] * eye + c[2] * A2 + c[4] * A4 + c[6] * A6
            + mm(A6, c[8] * A2 + c[10] * A4 + c[12] * A6))
    odd = mm(A, c[1] * eye + c[3] * A2 + c[5] * A4 + c[7] * A6
             + mm(A6, c[9] * A2 + c[11] * A4))
    U = even + odd

    for _ in range(scale_log2):                # undo the 1/2^s prescale by squaring
        U = mm(U, U)

    # rho <- U rho U^T (second product contracts last dims: no transpose materialized)
    rho = out_ref[...]
    t = mm(U, rho)
    out_ref[...] = lax.dot_general(t, U, (((1,), (1,)), ((), ())),
                                   preferred_element_type=jnp.float32)


# ----------------------------- wrapper ---------------------------------------

def _round_up(x, m):
    return ((x + m - 1) // m) * m


def _static_scale_log2(hamiltonians, max_abs_angle, *, target=1.0, fallback=6, max_s=24):
    """Static squaring count s with max_g |theta|*||H_g||_inf / 2^s <= target.

    Uses only the (static) Hamiltonians and a static angle bound, so it never
    inspects traced angles.  If H itself is a tracer (unusual — it is a constant
    in the module), fall back to a conservative default.
    """
    try:
        H = np.asarray(hamiltonians, dtype=np.float64)
    except (TypeError, jax.errors.ConcretizationTypeError):
        return fallback
    if H.size == 0:
        return 0
    worst = float(max_abs_angle) * float(np.max(np.sum(np.abs(H), axis=-1)))
    if worst <= target:
        return 0
    return int(min(max_s, math.ceil(math.log2(worst / target))))


def vqc_fock_bs_density(hamiltonians, angles, rho, *, max_abs_angle=1.0,
                        scale_log2=None):
    """Apply the full VQC (all gates, in order) to the input density matrix.

    max_abs_angle: static bound on |theta_g| used to size the expm scaling-and-
    squaring (the module initializes angles with torch.rand() in [0,1)).  Pass
    scale_log2 explicitly for trained / larger angles.
    """
    if scale_log2 is None:
        scale_log2 = _static_scale_log2(hamiltonians, max_abs_angle)

    hamiltonians = jnp.asarray(hamiltonians, jnp.float32)
    angles = jnp.asarray(angles, jnp.float32)
    rho = jnp.asarray(rho, jnp.float32)

    G, d, _ = hamiltonians.shape
    if G == 0:
        return rho

    # Pad only to a sublane/MXU-friendly multiple of 16 (NOT 128): every matmul
    # then runs at dr^3 instead of 128^3.  Zero padding is correct: expm of the
    # zero-padded A is block_diag(expm(A), I), and rho is zero outside d x d.
    dr = _round_up(d, 16)
    if dr != d:
        H_pad = jnp.zeros((G, dr, dr), jnp.float32).at[:, :d, :d].set(hamiltonians)
        rho_pad = jnp.zeros((dr, dr), jnp.float32).at[:d, :d].set(rho)
    else:
        H_pad, rho_pad = hamiltonians, rho

    # VMEM budget from the real live footprint (~14 polynomial temporaries +
    # double-buffered blocks), with a small floor; never clamped below it.
    f32 = 4
    vmem_bytes = int(min(max(24 * dr * dr * f32, 4 << 20), 112 << 20))

    rho_out = pl.pallas_call(
        functools.partial(_vqc_kernel, scale_log2=scale_log2),
        out_shape=jax.ShapeDtypeStruct((dr, dr), jnp.float32),
        grid_spec=pltpu.PrefetchScalarGridSpec(
            num_scalar_prefetch=1,                 # angles -> SMEM
            grid=(G,),                             # one gate per step (streamed)
            in_specs=[
                pl.BlockSpec((1, dr, dr), lambda g, ang: (g, 0, 0)),  # H_g block
                pl.BlockSpec((dr, dr), lambda g, ang: (0, 0)),        # initial rho
            ],
            out_specs=pl.BlockSpec((dr, dr), lambda g, ang: (0, 0)),  # revisited acc
        ),
        compiler_params=pltpu.CompilerParams(
            dimension_semantics=("arbitrary",),    # serial dependency through rho
            vmem_limit_bytes=vmem_bytes),
    )(angles, H_pad, rho_pad)

    return rho_out[:d, :d]


# ----------------------------- reference (plain JAX) ------------------------

def reference(hamiltonians, angles, rho):
    for g in range(hamiltonians.shape[0]):
        U = expm(-angles[g] * hamiltonians[g])
        rho = U @ rho @ U.T
    return rho


# ----------------------------- main ------------------------------------------

if __name__ == "__main__":
    n_photons, n_modes = 2, 4                       # Fock dim d = C(5,2) = 10
    list_gates = [(0, 1), (1, 2), (2, 3)]
    G = len(list_gates)

    Hs_np = np.stack([fock_bs_hamiltonian(n_photons, n_modes, m1, m2)
                      for (m1, m2) in list_gates])
    d = Hs_np.shape[-1]

    key = jax.random.PRNGKey(0)
    k_ang, k_rho = jax.random.split(key)
    # one angle per gate, ~ torch.rand(()) in the module's __init__
    angles = jax.random.uniform(k_ang, (G,), dtype=jnp.float32)
    # deterministic symmetric PSD density matrix with unit trace
    x = jax.random.normal(k_rho, (d, d), dtype=jnp.float32)
    rho0 = x @ x.T
    rho0 = rho0 / jnp.trace(rho0)

    # Hamiltonians passed as NumPy -> scale_log2 derived statically, no host sync.
    out = jax.block_until_ready(vqc_fock_bs_density(Hs_np, angles, rho0))

    ref = np.asarray(reference(jnp.asarray(Hs_np, jnp.float32), angles, rho0))
    if not np.allclose(np.asarray(out), ref, atol=1e-4, rtol=1e-4):
        raise AssertionError("Pallas kernel result does not match JAX reference")
    print("KERNEL_OK")
</pallas_src>

<mosaic_0001>
module attributes {stable_mosaic.version = 11 : i64} {
  func.func @_vqc_kernel(%arg0: i32, %arg1: memref<3xf32, #tpu.memory_space<smem>>, %arg2: memref<1x16x16xf32, #tpu.memory_space<vmem>>, %arg3: memref<16x16xf32, #tpu.memory_space<vmem>>, %arg4: memref<16x16xf32, #tpu.memory_space<vmem>>) attributes {dimension_semantics = [#tpu.dimension_semantics<arbitrary>], iteration_bounds = array<i64: 3>, scalar_prefetch = 1 : i64, scratch_operands = 0 : i64, tpu.core_type = #tpu.core_type<tc>, window_params = [{transform_indices = @transform_0, window_bounds = array<i64: 1, 16, 16>}, {pipeline_mode = #tpu.pipeline_mode<synchronous>, transform_indices = @transform_1, window_bounds = array<i64: 16, 16>}, {pipeline_mode = #tpu.pipeline_mode<synchronous>, transform_indices = @transform_2, window_bounds = array<i64: 16, 16>}]} {
    %c0_i32 = arith.constant 0 : i32
    %0 = arith.cmpi eq, %arg0, %c0_i32 : i32
    %1 = arith.extui %0 : i1 to i32
    %c0_i32_0 = arith.constant 0 : i32
    %2 = arith.cmpi ne, %1, %c0_i32_0 : i32
    scf.if %2 {
      %c0_31 = arith.constant 0 : index
      %c0_32 = arith.constant 0 : index
      %66 = vector.load %arg3[%c0_31, %c0_32] : memref<16x16xf32, #tpu.memory_space<vmem>>, vector<16x16xf32>
      %c0_33 = arith.constant 0 : index
      %c0_34 = arith.constant 0 : index
      %67 = vector.load %arg4[%c0_33, %c0_34] : memref<16x16xf32, #tpu.memory_space<vmem>>, vector<16x16xf32>
      tpu.vector_store %arg4[%c0_33, %c0_34], %66 {strides = array<i32>} : memref<16x16xf32, #tpu.memory_space<vmem>>, vector<16x16xf32>,
    } else {
    }
    %3 = arith.index_cast %arg0 : i32 to index
    %4 = memref.load %arg1[%3] : memref<3xf32, #tpu.memory_space<smem>>
    %cst = arith.constant 0.000000e+00 : f32
    %5 = arith.subf %cst, %4 : f32
    %cst_1 = arith.constant 2.500000e-01 : f32
    %6 = arith.mulf %5, %cst_1 : f32
    %c0 = arith.constant 0 : index
    %c0_2 = arith.constant 0 : index
    %c0_3 = arith.constant 0 : index
    %7 = vector.load %arg2[%c0, %c0_2, %c0_3] : memref<1x16x16xf32, #tpu.memory_space<vmem>>, vector<1x16x16xf32>
    %8 = vector.shape_cast %7 : vector<1x16x16xf32> to vector<16x16xf32>
    %9 = vector.broadcast %6 : f32 to vector<16x16xf32>
    %10 = arith.mulf %9, %8 : vector<16x16xf32>
    %11 = tpu.iota {dimensions = array<i32: 0>} : vector<16x16xi32>
    %12 = tpu.iota {dimensions = array<i32: 1>} : vector<16x16xi32>
    %13 = arith.cmpi eq, %11, %12 : vector<16x16xi32>
    %14 = arith.extui %13 : vector<16x16xi1> to vector<16x16xi32>
    %15 = arith.sitofp %14 : vector<16x16xi32> to vector<16x16xf32>
    %cst_4 = arith.constant dense<0.000000e+00> : vector<16x16xf32>
    %16 = tpu.matmul %10, %10, %cst_4 {dimension_numbers = #tpu.dot_dimension_numbers<[1], [0], [0], [1], [0, 0, 1, 1], [], []>} : vector<16x16xf32>, vector<16x16xf32>, vector<16x16xf32> -> vector<16x16xf32>
    %cst_5 = arith.constant dense<0.000000e+00> : vector<16x16xf32>
    %17 = tpu.matmul %16, %16, %cst_5 {dimension_numbers = #tpu.dot_dimension_numbers<[1], [0], [0], [1], [0, 0, 1, 1], [], []>} : vector<16x16xf32>, vector<16x16xf32>, vector<16x16xf32> -> vector<16x16xf32>
    %cst_6 = arith.constant dense<0.000000e+00> : vector<16x16xf32>
    %18 = tpu.matmul %16, %17, %cst_6 {dimension_numbers = #tpu.dot_dimension_numbers<[1], [0], [0], [1], [0, 0, 1, 1], [], []>} : vector<16x16xf32>, vector<16x16xf32>, vector<16x16xf32> -> vector<16x16xf32>
    %cst_7 = arith.constant 1.000000e+00 : f32
    %19 = vector.broadcast %cst_7 : f32 to vector<16x16xf32>
    %20 = arith.mulf %19, %15 : vector<16x16xf32>
    %cst_8 = arith.constant 5.000000e-01 : f32
    %21 = vector.broadcast %cst_8 : f32 to vector<16x16xf32>
    %22 = arith.mulf %21, %16 : vector<16x16xf32>
    %23 = arith.addf %20, %22 : vector<16x16xf32>
    %cst_9 = arith.constant 0.0416666679 : f32
    %24 = vector.broadcast %cst_9 : f32 to vector<16x16xf32>
    %25 = arith.mulf %24, %17 : vector<16x16xf32>
    %26 = arith.addf %23, %25 : vector<16x16xf32>
    %cst_10 = arith.constant 0.00138888892 : f32
    %27 = vector.broadcast %cst_10 : f32 to vector<16x16xf32>
    %28 = arith.mulf %27, %18 : vector<16x16xf32>
    %29 = arith.addf %26, %28 : vector<16x16xf32>
    %cst_11 = arith.constant 2.48015876E-5 : f32
    %30 = vector.broadcast %cst_11 : f32 to vector<16x16xf32>
    %31 = arith.mulf %30, %16 : vector<16x16xf32>
    %cst_12 = arith.constant 2.755732E-7 : f32
    %32 = vector.broadcast %cst_12 : f32 to vector<16x16xf32>
    %33 = arith.mulf %32, %17 : vector<16x16xf32>
    %34 = arith.addf %31, %33 : vector<16x16xf32>
    %cst_13 = arith.constant 2.08767559E-9 : f32
    %35 = vector.broadcast %cst_13 : f32 to vector<16x16xf32>
    %36 = arith.mulf %35, %18 : vector<16x16xf32>
    %37 = arith.addf %34, %36 : vector<16x16xf32>
    %cst_14 = arith.constant dense<0.000000e+00> : vector<16x16xf32>
    %38 = tpu.matmul %18, %37, %cst_14 {dimension_numbers = #tpu.dot_dimension_numbers<[1], [0], [0], [1], [0, 0, 1, 1], [], []>} : vector<16x16xf32>, vector<16x16xf32>, vector<16x16xf32> -> vector<16x16xf32>
    %39 = arith.addf %29, %38 : vector<16x16xf32>
    %cst_15 = arith.constant 1.000000e+00 : f32
    %40 = vector.broadcast %cst_15 : f32 to vector<16x16xf32>
    %41 = arith.mulf %40, %15 : vector<16x16xf32>
    %cst_16 = arith.constant 0.166666672 : f32
    %42 = vector.broadcast %cst_16 : f32 to vector<16x16xf32>
    %43 = arith.mulf %42, %16 : vector<16x16xf32>
    %44 = arith.addf %41, %43 : vector<16x16xf32>
    %cst_17 = arith.constant 0.00833333377 : f32
    %45 = vector.broadcast %cst_17 : f32 to vector<16x16xf32>
    %46 = arith.mulf %45, %17 : vector<16x16xf32>
    %47 = arith.addf %44, %46 : vector<16x16xf32>
    %cst_18 = arith.constant 1.98412701E-4 : f32
    %48 = vector.broadcast %cst_18 : f32 to vector<16x16xf32>
    %49 = arith.mulf %48, %18 : vector<16x16xf32>
    %50 = arith.addf %47, %49 : vector<16x16xf32>
    %cst_19 = arith.constant 2.75573188E-6 : f32
    %51 = vector.broadcast %cst_19 : f32 to vector<16x16xf32>
    %52 = arith.mulf %51, %16 : vector<16x16xf32>
    %cst_20 = arith.constant 2.50521079E-8 : f32
    %53 = vector.broadcast %cst_20 : f32 to vector<16x16xf32>
    %54 = arith.mulf %53, %17 : vector<16x16xf32>
    %55 = arith.addf %52, %54 : vector<16x16xf32>
    %cst_21 = arith.constant dense<0.000000e+00> : vector<16x16xf32>
    %56 = tpu.matmul %18, %55, %cst_21 {dimension_numbers = #tpu.dot_dimension_numbers<[1], [0], [0], [1], [0, 0, 1, 1], [], []>} : vector<16x16xf32>, vector<16x16xf32>, vector<16x16xf32> -> vector<16x16xf32>
    %57 = arith.addf %50, %56 : vector<16x16xf32>
    %cst_22 = arith.constant dense<0.000000e+00> : vector<16x16xf32>
    %58 = tpu.matmul %10, %57, %cst_22 {dimension_numbers = #tpu.dot_dimension_numbers<[1], [0], [0], [1], [0, 0, 1, 1], [], []>} : vector<16x16xf32>, vector<16x16xf32>, vector<16x16xf32> -> vector<16x16xf32>
    %59 = arith.addf %39, %58 : vector<16x16xf32>
    %cst_23 = arith.constant dense<0.000000e+00> : vector<16x16xf32>
    %60 = tpu.matmul %59, %59, %cst_23 {dimension_numbers = #tpu.dot_dimension_numbers<[1], [0], [0], [1], [0, 0, 1, 1], [], []>} : vector<16x16xf32>, vector<16x16xf32>, vector<16x16xf32> -> vector<16x16xf32>
    %cst_24 = arith.constant dense<0.000000e+00> : vector<16x16xf32>
    %61 = tpu.matmul %60, %60, %cst_24 {dimension_numbers = #tpu.dot_dimension_numbers<[1], [0], [0], [1], [0, 0, 1, 1], [], []>} : vector<16x16xf32>, vector<16x16xf32>, vector<16x16xf32> -> vector<16x16xf32>
    %c0_25 = arith.constant 0 : index
    %c0_26 = arith.constant 0 : index
    %62 = vector.load %arg4[%c0_25, %c0_26] : memref<16x16xf32, #tpu.memory_space<vmem>>, vector<16x16xf32>
    %cst_27 = arith.constant dense<0.000000e+00> : vector<16x16xf32>
    %63 = tpu.matmul %61, %62, %cst_27 {dimension_numbers = #tpu.dot_dimension_numbers<[1], [0], [0], [1], [0, 0, 1, 1], [], []>} : vector<16x16xf32>, vector<16x16xf32>, vector<16x16xf32> -> vector<16x16xf32>
    %cst_28 = arith.constant dense<0.000000e+00> : vector<16x16xf32>
    %64 = tpu.matmul %63, %61, %cst_28 {dimension_numbers = #tpu.dot_dimension_numbers<[1], [1], [0], [0], [0, 0, 1, 0], [], []>} : vector<16x16xf32>, vector<16x16xf32>, vector<16x16xf32> -> vector<16x16xf32>
    %c0_29 = arith.constant 0 : index
    %c0_30 = arith.constant 0 : index
    %65 = vector.load %arg4[%c0_29, %c0_30] : memref<16x16xf32, #tpu.memory_space<vmem>>, vector<16x16xf32>
    tpu.vector_store %arg4[%c0_29, %c0_30], %64 {strides = array<i32>} : memref<16x16xf32, #tpu.memory_space<vmem>>, vector<16x16xf32>,
    return
  }
  func.func @transform_0(%arg0: i32, %arg1: memref<3xf32, #tpu.memory_space<smem>>) -> (i32, i32, i32) {
    %c0_i32 = arith.constant 0 : i32
    %c0_i32_0 = arith.constant 0 : i32
    %c0_i32_1 = arith.constant 0 : i32
    return %arg0, %c0_i32, %c0_i32_0 : i32, i32, i32
  }
  func.func @transform_1(%arg0: i32, %arg1: memref<3xf32, #tpu.memory_space<smem>>) -> (i32, i32) {
    %c0_i32 = arith.constant 0 : i32
    %c0_i32_0 = arith.constant 0 : i32
    %c0_i32_1 = arith.constant 0 : i32
    return %c0_i32, %c0_i32_0 : i32, i32
  }
  func.func @transform_2(%arg0: i32, %arg1: memref<3xf32, #tpu.memory_space<smem>>) -> (i32, i32) {
    %c0_i32 = arith.constant 0 : i32
    %c0_i32_0 = arith.constant 0 : i32
    %c0_i32_1 = arith.constant 0 : i32
    return %c0_i32, %c0_i32_0 : i32, i32
  }
}

</mosaic_0001>

<llo_original>
// kernel: tpu_custom_call.1
$region0: #{tpu_custom_call.1}
  #allocation0 [shape = 'u32[]', space=smem, size = 0x4, offset = 0x4, fixed_abs, tag = 'smem constant byte address 0x4 - core index']
  #allocation1 [shape = 'u32[144,128]{1,0:T(1,128)}', space=vmem, size = 0x12000, scoped, tag = 'internal scratch']
  #allocation2 [shape = 's32[1]{0}', space=sflag, size = 0x4, scoped, tag = 'scoped memory for tpu_custom_call.1']
  #allocation3 [shape = 'u8[512]{0}', space=smem, size = 0x200, scoped, tag = 'prefetched SMEM operand 0']
  %s0 = inlined_call_operand.hbm [shape: f32[3], index: 0, kind: input, shape index: {}]
  %s1 = inlined_call_operand.hbm [shape: f32[3,16,16], index: 1, kind: input, shape index: {}]
  %s2 = inlined_call_operand.hbm [shape: f32[16,16], index: 2, kind: input, shape index: {}]
  %s3 = inlined_call_operand.hbm [shape: f32[16,16], index: 3, kind: output, shape index: {}]
  %s4 = sld [smem:[#allocation0]]
  $region53: #{tpu_custom_call.1} parent=0
    _
  %s6 = ssub.s32 1, %s4
  %s7 = scalar_select 0, %s6, %s4
  %9 = dma.hbm_to_smem %s0, 16, [#allocation3], [#allocation2]
  %10 = dma.done [#allocation2], 16
  %11 = sfence
  $region1: #{tpu_custom_call.1} parent=0
    #allocation4 [shape = 'u8[16384]{0}', space=vmem, size = 0x4000, scoped, tag = 'input window, operand 1']
    #allocation5 [shape = 's32[2]{0}', space=sflag, size = 0x8, scoped, tag = 'scoped memory for tpu_custom_call.1']
    #allocation6 [shape = 's32[2]{0}', space=sflag, size = 0x8, scoped, tag = 'scoped memory for tpu_custom_call.1']
    #allocation7 [shape = 'u8[8192]{0}', space=vmem, size = 0x2000, scoped, tag = 'input window, operand 2, single buffered']
    #allocation8 [shape = 's32[1]{0}', space=sflag, size = 0x4, scoped, tag = 'scoped memory for tpu_custom_call.1']
    #allocation9 [shape = 'u8[8192]{0}', space=vmem, size = 0x2000, scoped, tag = 'output window, operand 0, single buffered']
    %12 = vsyncpa [#allocation5], 0
    %s13 = scalar_lea.sflag [#allocation5], 1
    %14 = vsyncpa %s13, 0
    %15 = vsyncpa [#allocation8], 0
    %16 = vsyncpa [#allocation6], 0
    loop: start=0, step=1, limit=5
    $region2: #{tpu_custom_call.1} parent=1 // loop_pre_header
      _
    $region3: #{tpu_custom_call.1} parent=1 // loop_header
      %s18 = sphi 0, %s22
      %p19 = scmp.ge.s32.totalorder %s18, 5
      %s28 = sphi 0, %s30
      %s31 = sphi 0, %s28
      %s32 = sphi 0, %s31
      %s48 = sphi 0, %s32
      %s52 = sphi 0, %s52
      %s54 = sphi 0, %s52
      %s55 = sphi 0, %s54
      %s69 = sphi 0, %s55
      %s73 = sphi 0, %s73
      %s75 = sphi 0, %s73
      %s76 = sphi 0, %s75
      %s90 = sphi 0, %s76
    $region4: #{tpu_custom_call.1} parent=1 // loop_header_branch
      %21 = sbr.rel (%p19) target = $region8
    $region5: #{tpu_custom_call.1} parent=1 // loop_body
      %s23 = ssub.s32 %s18, 1
      %s24 = ssub.s32 %s18, 2
      %s25 = sadd.s32 %s18, 1
      %s26 = ssub.s32 %s18, %s25
      %p27 = scmp.eq.s32.totalorder %s26, 0
      %s29 = sadd.s32 %s28, 1
      %s30 = scalar_select %p27, %s28, %s29
      %p33 = pneg %p27
      %p34 = scmp.eq.s32.totalorder %s18, 2
      %p35 = por %p33, %p34
      %p36 = scmp.ne.s32.totalorder %s28, %s31
      %p37 = scmp.eq.s32.totalorder %s18, 0
      %p38 = por %p36, %p37
      %p39 = scmp.ne.s32.totalorder %s28, %s31
      %p40 = scmp.eq.s32.totalorder %s23, 2
      %p41 = por %p39, %p40
      %p42 = scmp.ne.s32.totalorder %s31, %s32
      %p43 = scmp.eq.s32.totalorder %s23, 0
      %p44 = por %p42, %p43
      %p45 = scmp.ne.s32.totalorder %s31, %s32
      %p46 = scmp.eq.s32.totalorder %s24, 2
      %p47 = por %p45, %p46
      %p49 = scmp.ne.s32.totalorder %s32, %s48
      %p50 = scmp.eq.s32.totalorder %s24, 0
      %p51 = por %p49, %p50
      %s53 = sadd.s32 %s52, 1
      %p56 = scmp.eq.s32.totalorder %s18, 2
      %p57 = scmp.ne.s32.totalorder %s52, %s54
      %p58 = scmp.eq.s32.totalorder %s18, 0
      %p59 = por %p57, %p58
      %p60 = scmp.ne.s32.totalorder %s52, %s54
      %p61 = scmp.eq.s32.totalorder %s23, 2
      %p62 = por %p60, %p61
      %p63 = scmp.ne.s32.totalorder %s54, %s55
      %p64 = scmp.eq.s32.totalorder %s23, 0
      %p65 = por %p63, %p64
      %p66 = scmp.ne.s32.totalorder %s54, %s55
      %p67 = scmp.eq.s32.totalorder %s24, 2
      %p68 = por %p66, %p67
      %p70 = scmp.ne.s32.totalorder %s55, %s69
      %p71 = scmp.eq.s32.totalorder %s24, 0
      %p72 = por %p70, %p71
      %s74 = sadd.s32 %s73, 1
      %p77 = scmp.eq.s32.totalorder %s18, 2
      %p78 = scmp.ne.s32.totalorder %s73, %s75
      %p79 = scmp.eq.s32.totalorder %s18, 0
      %p80 = por %p78, %p79
      %p81 = scmp.ne.s32.totalorder %s73, %s75
      %p82 = scmp.eq.s32.totalorder %s23, 2
      %p83 = por %p81, %p82
      %p84 = scmp.ne.s32.totalorder %s75, %s76
      %p85 = scmp.eq.s32.totalorder %s23, 0
      %p86 = por %p84, %p85
      %p87 = scmp.ne.s32.totalorder %s75, %s76
      %p88 = scmp.eq.s32.totalorder %s24, 2
      %p89 = por %p87, %p88
      %p91 = scmp.ne.s32.totalorder %s76, %s90
      %p92 = scmp.eq.s32.totalorder %s24, 0
      %p93 = por %p91, %p92
      %p94 = scmp.le.s32.totalorder 1, %s18
      %p95 = scmp.lt.s32.totalorder %s18, 4
      %p96 = pnand %p94, %p95
      %p97 = pneg %p96
      // Predicated region
      $region9: #{tpu_custom_call.1} parent=5 // pred_check
        _
      $region10: #{tpu_custom_call.1} parent=5 // pred_check_branch
        %99 = sbr.rel (%p96) target = $region12
      $region11: #{tpu_custom_call.1} parent=5 // pred_region
        %s100 = ssub.s32 %s18, 1
        // Predicated region
        $region13: #{tpu_custom_call.1} parent=11 // pred_check
          %p101 = pneg %p65
        $region14: #{tpu_custom_call.1} parent=11 // pred_check_branch
          %103 = sbr.rel (%p101) target = $region16
        $region15: #{tpu_custom_call.1} parent=11 // pred_region
          %s105 = ssub.s32 256, 256
          %106 = vsyncadd [#allocation8], %s105
          %s107 = sshll.u32 [#allocation7], 4
          %s108 = int_to_ptr.vmem [resolvable:$true] %s107
          %113 = dma.hbm_to_vmem [thread:$0]  %s2, 256, %s108, [#allocation8], 128, 128, 8
        $region16: #{tpu_custom_call.1} parent=11 // pred_fallthru
          _
      $region12: #{tpu_custom_call.1} parent=5 // pred_fallthru
        _
      %p114 = scmp.lt.s32.totalorder %s18, 3
      // Predicated region
      $region17: #{tpu_custom_call.1} parent=5 // pred_check
        %p115 = pneg %p114
      $region18: #{tpu_custom_call.1} parent=5 // pred_check_branch
        %117 = sbr.rel (%p115) target = $region20
      $region19: #{tpu_custom_call.1} parent=5 // pred_region
        // Predicated region
        $region21: #{tpu_custom_call.1} parent=19 // pred_check
          %p118 = pneg %p38
        $region22: #{tpu_custom_call.1} parent=19 // pred_check_branch
          %120 = sbr.rel (%p118) target = $region24
        $region23: #{tpu_custom_call.1} parent=19 // pred_region
          %s121 = sand.u32 %s28, 1
          %s122 = scalar_lea.sflag [#allocation5], %s121
          %s123 = sand.u32 %s28, 1
          %s124 = smul.addr %s123, 16
          %s125 = scalar_lea.vmem [#allocation4], %s124
          %s127 = ssub.s32 256, 256
          %128 = vsyncadd %s122, %s127
          %s129 = smul.addr %s18, 2
          %s130 = smul.addr %s129, 128
          %s131 = scalar_lea.hbm %s1, %s130
          %s132 = sshll.u32 %s125, 4
          %s133 = int_to_ptr.vmem [resolvable:$true] %s132
          %138 = dma.hbm_to_vmem [thread:$0]  %s131, 256, %s133, %s122, 128, 128, 8
        $region24: #{tpu_custom_call.1} parent=19 // pred_fallthru
          _
      $region20: #{tpu_custom_call.1} parent=5 // pred_fallthru
        _
      %p139 = scmp.le.s32.totalorder 1, %s18
      %p140 = scmp.lt.s32.totalorder %s18, 4
      %p141 = pnand %p139, %p140
      %p142 = pneg %p141
      // Predicated region
      $region25: #{tpu_custom_call.1} parent=5 // pred_check
        _
      $region26: #{tpu_custom_call.1} parent=5 // pred_check_branch
        %144 = sbr.rel (%p141) target = $region28
      $region27: #{tpu_custom_call.1} parent=5 // pred_region
        %s145 = ssub.s32 %s18, 1
        %s146 = sand.u32 %s31, 1
        %s147 = scalar_lea.sflag [#allocation5], %s146
        %s148 = sand.u32 %s31, 1
        %s149 = smul.addr %s148, 16
        %s150 = scalar_lea.vmem [#allocation4], %s149
        // Predicated region
        $region29: #{tpu_custom_call.1} parent=27 // pred_check
          %p151 = pneg %p44
        $region30: #{tpu_custom_call.1} parent=27 // pred_check_branch
          %153 = sbr.rel (%p151) target = $region32
        $region31: #{tpu_custom_call.1} parent=27 // pred_region
          %154 = dma.done %s147, 256
        $region32: #{tpu_custom_call.1} parent=27 // pred_fallthru
          _
        // Predicated region
        $region33: #{tpu_custom_call.1} parent=27 // pred_check
          %p155 = pneg %p65
        $region34: #{tpu_custom_call.1} parent=27 // pred_check_branch
          %157 = sbr.rel (%p155) target = $region36
        $region35: #{tpu_custom_call.1} parent=27 // pred_region
          %158 = dma.done [#allocation8], 256
        $region36: #{tpu_custom_call.1} parent=27 // pred_fallthru
          _
        %s159 = sand.u32 %s31, 1
        %s160 = scalar_lea.sflag [#allocation5], %s159
        %s161 = sand.u32 %s31, 1
        %s162 = smul.addr %s161, 16
        %s163 = scalar_lea.vmem [#allocation4], %s162
        %p164 = pneg %p44
        %p165 = pneg %p41
        %p166 = pneg %p65
        %p167 = pneg %p62
        %p168 = pneg %p86
        %p169 = pneg %p83
        %p170 = scmp.eq.s32.totalorder %s23, 0
        // Predicated region
        $region37: #{tpu_custom_call.1} parent=27 // pred_check
          %p171 = pneg %p170
        $region38: #{tpu_custom_call.1} parent=27 // pred_check_branch
          %173 = sbr.rel (%p171) target = $region40
        $region39: #{tpu_custom_call.1} parent=27 // pred_region
          %v174 = vld [vmem:[#allocation7] sm:$0xff]
          %v175 = vld [vmem:[#allocation7 + $0x8] sm:$0xff]
          %vm176 = vcmask 130048
          %177 = vst.msk [vmem:[#allocation9] sm:$0xff] %vm176, %v174
          %178 = vst.msk [vmem:[#allocation9 + $0x8] sm:$0xff] %vm176, %v175
        $region40: #{tpu_custom_call.1} parent=27 // pred_fallthru
          _
        %s179 = sld [smem:[#allocation3 + %s23]]
        %s180 = ssub.f32 0.0, %s179
        %s181 = smul.f32 %s180, 0.25
        %v182 = vld [vmem:[%s150] sm:$0xff]
        %v183 = vld [vmem:[%s150 + $0x8] sm:$0xff]
        %v184 = vstv %s181
        %v185 = vmul.f32 %v184, %v182
        %v186 = vmul.f32 %v184, %v183
        %v187 = vlaneseq
        %v188 = vshrl.u32 %v187, 7
        %v189 = vadd.s32 %v188, 8
        %v190 = vlaneseq
        %v191 = vand.u32 %v190, 127
        %vm192 = vcmp.eq.s32.totalorder %v188, %v191
        %vm193 = vcmp.eq.s32.totalorder %v189, %v191
        %v194 = vsel %vm192, 1, 0
        %v195 = vsel %vm193, 1, 0
        %v196 = vcvt.s32.f32 %v194
        %v197 = vcvt.s32.f32 %v195
        %vm198 = vcmask 130048
        %v200 = vsel %vm198, %v185, 0
        %v203 = vsel %vm198, %v186, 0
        %205 = vmatprep.subr.mxu0 0.0
        %206 = vmatpush1.msra.mxu0 0.0
        %207 = vmatprep.subr.mxu0 0.0
        %208 = vmatpush1.msra.mxu0 0.0
        %209 = vmatprep.subr.mxu0 0.0
        %210 = vmatpush1.msra.mxu0 0.0
        %211 = vmatprep.subr.mxu0 0.0
        %212 = vmatpush1.msra.mxu0 0.0
        %213 = vmatprep.subr.mxu0 0.0
        %214 = vmatpush1.msra.mxu0 0.0
        %215 = vmatprep.subr.mxu0 0.0
        %216 = vmatpush1.msra.mxu0 0.0
        %217 = vmatprep.subr.mxu0 0.0
        %218 = vmatpush1.msra.mxu0 0.0
        %219 = vmatprep.subr.mxu0 0.0
        %220 = vmatpush1.msra.mxu0 0.0
        %221 = vmatprep.subr.mxu0 0.0
        %222 = vmatpush1.msra.mxu0 0.0
        %223 = vmatprep.subr.mxu0 0.0
        %224 = vmatpush1.msra.mxu0 0.0
        %225 = vmatprep.subr.mxu0 0.0
        %226 = vmatpush1.msra.mxu0 0.0
        %227 = vmatprep.subr.mxu0 0.0
        %228 = vmatpush1.msra.mxu0 0.0
        %229 = vmatprep.subr.mxu0 0.0
        %230 = vmatpush1.msra.mxu0 0.0
        %231 = vmatprep.subr.mxu0 0.0
        %232 = vmatpush1.msra.mxu0 0.0
        %233 = vmatprep.subr.mxu0 0.0
        %234 = vmatpush1.msra.mxu0 %v186
        %235 = vmatprep.subr.mxu0 0.0
        %236 = vmatpush1.msra.mxu0 %v185
        %237 = vmatprep.subr.mxu0 0.0
        %238 = vmatpush2.msra.mxu0 0.0
        %239 = vmatprep.subr.mxu0 0.0
        %240 = vmatpush2.msra.mxu0 0.0
        %241 = vmatprep.subr.mxu0 0.0
        %242 = vmatpush2.msra.mxu0 0.0
        %243 = vmatprep.subr.mxu0 0.0
        %244 = vmatpush2.msra.mxu0 0.0
        %245 = vmatprep.subr.mxu0 0.0
        %246 = vmatpush2.msra.mxu0 0.0
        %247 = vmatprep.subr.mxu0 0.0
        %248 = vmatpush2.msra.mxu0 0.0
        %249 = vmatprep.subr.mxu0 0.0
        %250 = vmatpush2.msra.mxu0 0.0
        %251 = vmatprep.subr.mxu0 0.0
        %252 = vmatpush2.msra.mxu0 0.0
        %253 = vmatprep.subr.mxu0 0.0
        %254 = vmatpush2.msra.mxu0 0.0
        %255 = vmatprep.subr.mxu0 0.0
        %256 = vmatpush2.msra.mxu0 0.0
        %257 = vmatprep.subr.mxu0 0.0
        %258 = vmatpush2.msra.mxu0 0.0
        %259 = vmatprep.subr.mxu0 0.0
        %260 = vmatpush2.msra.mxu0 0.0
        %261 = vmatprep.subr.mxu0 0.0
        %262 = vmatpush2.msra.mxu0 0.0
        %263 = vmatprep.subr.mxu0 0.0
        %264 = vmatpush2.msra.mxu0 0.0
        %265 = vmatprep.subr.mxu0 0.0
        %266 = vmatpush2.msra.mxu0 0.0
        %267 = vmatprep.subr.mxu0 0.0
        %268 = vmatpush2.msra.mxu0 0.0
        %269 = vmatprep.mubr.f32.mxu0 0.0
        %270 = vmatmul.mubr.f32.gmra.mxu0 %v200
        %v271 = vpop.f32.mrf.mxu0
        %v272 = vadd.f32 0.0, %v271
        %v273 = vpop.f32.mrf.mxu0
        %274 = vmatprep.mubr.f32.mxu0 0.0
        %275 = vmatmul.mubr.f32.gmra.mxu0 %v203
        %v276 = vpop.f32.mrf.mxu0
        %v277 = vadd.f32 0.0, %v276
        %v278 = vpop.f32.mrf.mxu0
        %279 = vdwg.mxu0
        %v281 = vsel %vm198, %v272, 0
        %v284 = vsel %vm198, %v277, 0
        %286 = vmatprep.subr.mxu0 0.0
        %287 = vmatpush1.msra.mxu0 0.0
        %288 = vmatprep.subr.mxu0 0.0
        %289 = vmatpush1.msra.mxu0 0.0
        %290 = vmatprep.subr.mxu0 0.0
        %291 = vmatpush1.msra.mxu0 0.0
        %292 = vmatprep.subr.mxu0 0.0
        %293 = vmatpush1.msra.mxu0 0.0
        %294 = vmatprep.subr.mxu0 0.0
        %295 = vmatpush1.msra.mxu0 0.0
        %296 = vmatprep.subr.mxu0 0.0
        %297 = vmatpush1.msra.mxu0 0.0
        %298 = vmatprep.subr.mxu0 0.0
        %299 = vmatpush1.msra.mxu0 0.0
        %300 = vmatprep.subr.mxu0 0.0
        %301 = vmatpush1.msra.mxu0 0.0
        %302 = vmatprep.subr.mxu0 0.0
        %303 = vmatpush1.msra.mxu0 0.0
        %304 = vmatprep.subr.mxu0 0.0
        %305 = vmatpush1.msra.mxu0 0.0
        %306 = vmatprep.subr.mxu0 0.0
        %307 = vmatpush1.msra.mxu0 0.0
        %308 = vmatprep.subr.mxu0 0.0
        %309 = vmatpush1.msra.mxu0 0.0
        %310 = vmatprep.subr.mxu0 0.0
        %311 = vmatpush1.msra.mxu0 0.0
        %312 = vmatprep.subr.mxu0 0.0
        %313 = vmatpush1.msra.mxu0 0.0
        %314 = vmatprep.subr.mxu0 0.0
        %315 = vmatpush1.msra.mxu0 %v277
        %316 = vmatprep.subr.mxu0 0.0
        %317 = vmatpush1.msra.mxu0 %v272
        %318 = vmatprep.subr.mxu0 0.0
        %319 = vmatpush2.msra.mxu0 0.0
        %320 = vmatprep.subr.mxu0 0.0
        %321 = vmatpush2.msra.mxu0 0.0
        %322 = vmatprep.subr.mxu0 0.0
        %323 = vmatpush2.msra.mxu0 0.0
        %324 = vmatprep.subr.mxu0 0.0
        %325 = vmatpush2.msra.mxu0 0.0
        %326 = vmatprep.subr.mxu0 0.0
        %327 = vmatpush2.msra.mxu0 0.0
        %328 = vmatprep.subr.mxu0 0.0
        %329 = vmatpush2.msra.mxu0 0.0
        %330 = vmatprep.subr.mxu0 0.0
        %331 = vmatpush2.msra.mxu0 0.0
        %332 = vmatprep.subr.mxu0 0.0
        %333 = vmatpush2.msra.mxu0 0.0
        %334 = vmatprep.subr.mxu0 0.0
        %335 = vmatpush2.msra.mxu0 0.0
        %336 = vmatprep.subr.mxu0 0.0
        %337 = vmatpush2.msra.mxu0 0.0
        %338 = vmatprep.subr.mxu0 0.0
        %339 = vmatpush2.msra.mxu0 0.0
        %340 = vmatprep.subr.mxu0 0.0
        %341 = vmatpush2.msra.mxu0 0.0
        %342 = vmatprep.subr.mxu0 0.0
        %343 = vmatpush2.msra.mxu0 0.0
        %344 = vmatprep.subr.mxu0 0.0
        %345 = vmatpush2.msra.mxu0 0.0
        %346 = vmatprep.subr.mxu0 0.0
        %347 = vmatpush2.msra.mxu0 0.0
        %348 = vmatprep.subr.mxu0 0.0
        %349 = vmatpush2.msra.mxu0 0.0
        %350 = vmatprep.mubr.f32.mxu0 0.0
        %351 = vmatmul.mubr.f32.gmra.mxu0 %v281
        %v352 = vpop.f32.mrf.mxu0
        %v353 = vadd.f32 0.0, %v352
        %v354 = vpop.f32.mrf.mxu0
        %355 = vmatprep.mubr.f32.mxu0 0.0
        %356 = vmatmul.mubr.f32.gmra.mxu0 %v284
        %v357 = vpop.f32.mrf.mxu0
        %v358 = vadd.f32 0.0, %v357
        %v359 = vpop.f32.mrf.mxu0
        %360 = vdwg.mxu0
        %361 = vmatprep.subr.mxu0 0.0
        %362 = vmatpush1.msra.mxu0 0.0
        %363 = vmatprep.subr.mxu0 0.0
        %364 = vmatpush1.msra.mxu0 0.0
        %365 = vmatprep.subr.mxu0 0.0
        %366 = vmatpush1.msra.mxu0 0.0
        %367 = vmatprep.subr.mxu0 0.0
        %368 = vmatpush1.msra.mxu0 0.0
        %369 = vmatprep.subr.mxu0 0.0
        %370 = vmatpush1.msra.mxu0 0.0
        %371 = vmatprep.subr.mxu0 0.0
        %372 = vmatpush1.msra.mxu0 0.0
        %373 = vmatprep.subr.mxu0 0.0
        %374 = vmatpush1.msra.mxu0 0.0
        %375 = vmatprep.subr.mxu0 0.0
        %376 = vmatpush1.msra.mxu0 0.0
        %377 = vmatprep.subr.mxu0 0.0
        %378 = vmatpush1.msra.mxu0 0.0
        %379 = vmatprep.subr.mxu0 0.0
        %380 = vmatpush1.msra.mxu0 0.0
        %381 = vmatprep.subr.mxu0 0.0
        %382 = vmatpush1.msra.mxu0 0.0
        %383 = vmatprep.subr.mxu0 0.0
        %384 = vmatpush1.msra.mxu0 0.0
        %385 = vmatprep.subr.mxu0 0.0
        %386 = vmatpush1.msra.mxu0 0.0
        %387 = vmatprep.subr.mxu0 0.0
        %388 = vmatpush1.msra.mxu0 0.0
        %389 = vmatprep.subr.mxu0 0.0
        %390 = vmatpush1.msra.mxu0 %v358
        %391 = vmatprep.subr.mxu0 0.0
        %392 = vmatpush1.msra.mxu0 %v353
        %393 = vmatprep.subr.mxu0 0.0
        %394 = vmatpush2.msra.mxu0 0.0
        %395 = vmatprep.subr.mxu0 0.0
        %396 = vmatpush2.msra.mxu0 0.0
        %397 = vmatprep.subr.mxu0 0.0
        %398 = vmatpush2.msra.mxu0 0.0
        %399 = vmatprep.subr.mxu0 0.0
        %400 = vmatpush2.msra.mxu0 0.0
        %401 = vmatprep.subr.mxu0 0.0
        %402 = vmatpush2.msra.mxu0 0.0
        %403 = vmatprep.subr.mxu0 0.0
        %404 = vmatpush2.msra.mxu0 0.0
        %405 = vmatprep.subr.mxu0 0.0
        %406 = vmatpush2.msra.mxu0 0.0
        %407 = vmatprep.subr.mxu0 0.0
        %408 = vmatpush2.msra.mxu0 0.0
        %409 = vmatprep.subr.mxu0 0.0
        %410 = vmatpush2.msra.mxu0 0.0
        %411 = vmatprep.subr.mxu0 0.0
        %412 = vmatpush2.msra.mxu0 0.0
        %413 = vmatprep.subr.mxu0 0.0
        %414 = vmatpush2.msra.mxu0 0.0
        %415 = vmatprep.subr.mxu0 0.0
        %416 = vmatpush2.msra.mxu0 0.0
        %417 = vmatprep.subr.mxu0 0.0
        %418 = vmatpush2.msra.mxu0 0.0
        %419 = vmatprep.subr.mxu0 0.0
        %420 = vmatpush2.msra.mxu0 0.0
        %421 = vmatprep.subr.mxu0 0.0
        %422 = vmatpush2.msra.mxu0 0.0
        %423 = vmatprep.subr.mxu0 0.0
        %424 = vmatpush2.msra.mxu0 0.0
        %425 = vmatprep.mubr.f32.mxu0 0.0
        %426 = vmatmul.mubr.f32.gmra.mxu0 %v281
        %v427 = vpop.f32.mrf.mxu0
        %v428 = vadd.f32 0.0, %v427
        %v429 = vpop.f32.mrf.mxu0
        %430 = vmatprep.mubr.f32.mxu0 0.0
        %431 = vmatmul.mubr.f32.gmra.mxu0 %v284
        %v432 = vpop.f32.mrf.mxu0
        %v433 = vadd.f32 0.0, %v432
        %v434 = vpop.f32.mrf.mxu0
        %435 = vdwg.mxu0
        %v436 = vmul.f32 %v272, 0.5
        %v437 = vmul.f32 %v277, 0.5
        %v438 = vadd.f32 %v196, %v436
        %v439 = vadd.f32 %v197, %v437
        %v440 = vmul.f32 %v353, 0.041666668
        %v441 = vmul.f32 %v358, 0.041666668
        %v442 = vadd.f32 %v438, %v440
        %v443 = vadd.f32 %v439, %v441
        %v444 = vmul.f32 %v428, 0.0013888889
        %v445 = vmul.f32 %v433, 0.0013888889
        %v446 = vadd.f32 %v442, %v444
        %v447 = vadd.f32 %v443, %v445
        %v448 = vmul.f32 %v272, 2.4801588e-05
        %v449 = vmul.f32 %v277, 2.4801588e-05
        %v450 = vmul.f32 %v353, 2.755732e-07
        %v451 = vmul.f32 %v358, 2.755732e-07
        %v452 = vadd.f32 %v448, %v450
        %v453 = vadd.f32 %v449, %v451
        %v454 = vmul.f32 %v428, 2.0876756e-09
        %v455 = vmul.f32 %v433, 2.0876756e-09
        %v456 = vadd.f32 %v452, %v454
        %v457 = vadd.f32 %v453, %v455
        %v459 = vsel %vm198, %v428, 0
        %v462 = vsel %vm198, %v433, 0
        %464 = vmatprep.subr.mxu0 0.0
        %465 = vmatpush1.msra.mxu0 0.0
        %466 = vmatprep.subr.mxu0 0.0
        %467 = vmatpush1.msra.mxu0 0.0
        %468 = vmatprep.subr.mxu0 0.0
        %469 = vmatpush1.msra.mxu0 0.0
        %470 = vmatprep.subr.mxu0 0.0
        %471 = vmatpush1.msra.mxu0 0.0
        %472 = vmatprep.subr.mxu0 0.0
        %473 = vmatpush1.msra.mxu0 0.0
        %474 = vmatprep.subr.mxu0 0.0
        %475 = vmatpush1.msra.mxu0 0.0
        %476 = vmatprep.subr.mxu0 0.0
        %477 = vmatpush1.msra.mxu0 0.0
        %478 = vmatprep.subr.mxu0 0.0
        %479 = vmatpush1.msra.mxu0 0.0
        %480 = vmatprep.subr.mxu0 0.0
        %481 = vmatpush1.msra.mxu0 0.0
        %482 = vmatprep.subr.mxu0 0.0
        %483 = vmatpush1.msra.mxu0 0.0
        %484 = vmatprep.subr.mxu0 0.0
        %485 = vmatpush1.msra.mxu0 0.0
        %486 = vmatprep.subr.mxu0 0.0
        %487 = vmatpush1.msra.mxu0 0.0
        %488 = vmatprep.subr.mxu0 0.0
        %489 = vmatpush1.msra.mxu0 0.0
        %490 = vmatprep.subr.mxu0 0.0
        %491 = vmatpush1.msra.mxu0 0.0
        %492 = vmatprep.subr.mxu0 0.0
        %493 = vmatpush1.msra.mxu0 %v457
        %494 = vmatprep.subr.mxu0 0.0
        %495 = vmatpush1.msra.mxu0 %v456
        %496 = vmatprep.subr.mxu0 0.0
        %497 = vmatpush2.msra.mxu0 0.0
        %498 = vmatprep.subr.mxu0 0.0
        %499 = vmatpush2.msra.mxu0 0.0
        %500 = vmatprep.subr.mxu0 0.0
        %501 = vmatpush2.msra.mxu0 0.0
        %502 = vmatprep.subr.mxu0 0.0
        %503 = vmatpush2.msra.mxu0 0.0
        %504 = vmatprep.subr.mxu0 0.0
        %505 = vmatpush2.msra.mxu0 0.0
        %506 = vmatprep.subr.mxu0 0.0
        %507 = vmatpush2.msra.mxu0 0.0
        %508 = vmatprep.subr.mxu0 0.0
        %509 = vmatpush2.msra.mxu0 0.0
        %510 = vmatprep.subr.mxu0 0.0
        %511 = vmatpush2.msra.mxu0 0.0
        %512 = vmatprep.subr.mxu0 0.0
        %513 = vmatpush2.msra.mxu0 0.0
        %514 = vmatprep.subr.mxu0 0.0
        %515 = vmatpush2.msra.mxu0 0.0
        %516 = vmatprep.subr.mxu0 0.0
        %517 = vmatpush2.msra.mxu0 0.0
        %518 = vmatprep.subr.mxu0 0.0
        %519 = vmatpush2.msra.mxu0 0.0
        %520 = vmatprep.subr.mxu0 0.0
        %521 = vmatpush2.msra.mxu0 0.0
        %522 = vmatprep.subr.mxu0 0.0
        %523 = vmatpush2.msra.mxu0 0.0
        %524 = vmatprep.subr.mxu0 0.0
        %525 = vmatpush2.msra.mxu0 0.0
        %526 = vmatprep.subr.mxu0 0.0
        %527 = vmatpush2.msra.mxu0 0.0
        %528 = vmatprep.mubr.f32.mxu0 0.0
        %529 = vmatmul.mubr.f32.gmra.mxu0 %v459
        %v530 = vpop.f32.mrf.mxu0
        %v531 = vadd.f32 0.0, %v530
        %v532 = vpop.f32.mrf.mxu0
        %533 = vmatprep.mubr.f32.mxu0 0.0
        %534 = vmatmul.mubr.f32.gmra.mxu0 %v462
        %v535 = vpop.f32.mrf.mxu0
        %v536 = vadd.f32 0.0, %v535
        %v537 = vpop.f32.mrf.mxu0
        %538 = vdwg.mxu0
        %v539 = vadd.f32 %v446, %v531
        %v540 = vadd.f32 %v447, %v536
        %v541 = vmul.f32 %v272, 0.16666667
        %v542 = vmul.f32 %v277, 0.16666667
        %v543 = vadd.f32 %v196, %v541
        %v544 = vadd.f32 %v197, %v542
        %v545 = vmul.f32 %v353, 0.008333334
        %v546 = vmul.f32 %v358, 0.008333334
        %v547 = vadd.f32 %v543, %v545
        %v548 = vadd.f32 %v544, %v546
        %v549 = vmul.f32 %v428, 0.0001984127
        %v550 = vmul.f32 %v433, 0.0001984127
        %v551 = vadd.f32 %v547, %v549
        %v552 = vadd.f32 %v548, %v550
        %v553 = vmul.f32 %v272, 2.7557319e-06
        %v554 = vmul.f32 %v277, 2.7557319e-06
        %v555 = vmul.f32 %v353, 2.5052108e-08
        %v556 = vmul.f32 %v358, 2.5052108e-08
        %v557 = vadd.f32 %v553, %v555
        %v558 = vadd.f32 %v554, %v556
        %559 = vmatprep.subr.mxu0 0.0
        %560 = vmatpush1.msra.mxu0 0.0
        %561 = vmatprep.subr.mxu0 0.0
        %562 = vmatpush1.msra.mxu0 0.0
        %563 = vmatprep.subr.mxu0 0.0
        %564 = vmatpush1.msra.mxu0 0.0
        %565 = vmatprep.subr.mxu0 0.0
        %566 = vmatpush1.msra.mxu0 0.0
        %567 = vmatprep.subr.mxu0 0.0
        %568 = vmatpush1.msra.mxu0 0.0
        %569 = vmatprep.subr.mxu0 0.0
        %570 = vmatpush1.msra.mxu0 0.0
        %571 = vmatprep.subr.mxu0 0.0
        %572 = vmatpush1.msra.mxu0 0.0
        %573 = vmatprep.subr.mxu0 0.0
        %574 = vmatpush1.msra.mxu0 0.0
        %575 = vmatprep.subr.mxu0 0.0
        %576 = vmatpush1.msra.mxu0 0.0
        %577 = vmatprep.subr.mxu0 0.0
        %578 = vmatpush1.msra.mxu0 0.0
        %579 = vmatprep.subr.mxu0 0.0
        %580 = vmatpush1.msra.mxu0 0.0
        %581 = vmatprep.subr.mxu0 0.0
        %582 = vmatpush1.msra.mxu0 0.0
        %583 = vmatprep.subr.mxu0 0.0
        %584 = vmatpush1.msra.mxu0 0.0
        %585 = vmatprep.subr.mxu0 0.0
        %586 = vmatpush1.msra.mxu0 0.0
        %587 = vmatprep.subr.mxu0 0.0
        %588 = vmatpush1.msra.mxu0 %v558
        %589 = vmatprep.subr.mxu0 0.0
        %590 = vmatpush1.msra.mxu0 %v557
        %591 = vmatprep.subr.mxu0 0.0
        %592 = vmatpush2.msra.mxu0 0.0
        %593 = vmatprep.subr.mxu0 0.0
        %594 = vmatpush2.msra.mxu0 0.0
        %595 = vmatprep.subr.mxu0 0.0
        %596 = vmatpush2.msra.mxu0 0.0
        %597 = vmatprep.subr.mxu0 0.0
        %598 = vmatpush2.msra.mxu0 0.0
        %599 = vmatprep.subr.mxu0 0.0
        %600 = vmatpush2.msra.mxu0 0.0
        %601 = vmatprep.subr.mxu0 0.0
        %602 = vmatpush2.msra.mxu0 0.0
        %603 = vmatprep.subr.mxu0 0.0
        %604 = vmatpush2.msra.mxu0 0.0
        %605 = vmatprep.subr.mxu0 0.0
        %606 = vmatpush2.msra.mxu0 0.0
        %607 = vmatprep.subr.mxu0 0.0
        %608 = vmatpush2.msra.mxu0 0.0
        %609 = vmatprep.subr.mxu0 0.0
        %610 = vmatpush2.msra.mxu0 0.0
        %611 = vmatprep.subr.mxu0 0.0
        %612 = vmatpush2.msra.mxu0 0.0
        %613 = vmatprep.subr.mxu0 0.0
        %614 = vmatpush2.msra.mxu0 0.0
        %615 = vmatprep.subr.mxu0 0.0
        %616 = vmatpush2.msra.mxu0 0.0
        %617 = vmatprep.subr.mxu0 0.0
        %618 = vmatpush2.msra.mxu0 0.0
        %619 = vmatprep.subr.mxu0 0.0
        %620 = vmatpush2.msra.mxu0 0.0
        %621 = vmatprep.subr.mxu0 0.0
        %622 = vmatpush2.msra.mxu0 0.0
        %623 = vmatprep.mubr.f32.mxu0 0.0
        %624 = vmatmul.mubr.f32.gmra.mxu0 %v459
        %v625 = vpop.f32.mrf.mxu0
        %v626 = vadd.f32 0.0, %v625
        %v627 = vpop.f32.mrf.mxu0
        %628 = vmatprep.mubr.f32.mxu0 0.0
        %629 = vmatmul.mubr.f32.gmra.mxu0 %v462
        %v630 = vpop.f32.mrf.mxu0
        %v631 = vadd.f32 0.0, %v630
        %v632 = vpop.f32.mrf.mxu0
        %633 = vdwg.mxu0
        %v634 = vadd.f32 %v551, %v626
        %v635 = vadd.f32 %v552, %v631
        %636 = vmatprep.subr.mxu0 0.0
        %637 = vmatpush1.msra.mxu0 0.0
        %638 = vmatprep.subr.mxu0 0.0
        %639 = vmatpush1.msra.mxu0 0.0
        %640 = vmatprep.subr.mxu0 0.0
        %641 = vmatpush1.msra.mxu0 0.0
        %642 = vmatprep.subr.mxu0 0.0
        %643 = vmatpush1.msra.mxu0 0.0
        %644 = vmatprep.subr.mxu0 0.0
        %645 = vmatpush1.msra.mxu0 0.0
        %646 = vmatprep.subr.mxu0 0.0
        %647 = vmatpush1.msra.mxu0 0.0
        %648 = vmatprep.subr.mxu0 0.0
        %649 = vmatpush1.msra.mxu0 0.0
        %650 = vmatprep.subr.mxu0 0.0
        %651 = vmatpush1.msra.mxu0 0.0
        %652 = vmatprep.subr.mxu0 0.0
        %653 = vmatpush1.msra.mxu0 0.0
        %654 = vmatprep.subr.mxu0 0.0
        %655 = vmatpush1.msra.mxu0 0.0
        %656 = vmatprep.subr.mxu0 0.0
        %657 = vmatpush1.msra.mxu0 0.0
        %658 = vmatprep.subr.mxu0 0.0
        %659 = vmatpush1.msra.mxu0 0.0
        %660 = vmatprep.subr.mxu0 0.0
        %661 = vmatpush1.msra.mxu0 0.0
        %662 = vmatprep.subr.mxu0 0.0
        %663 = vmatpush1.msra.mxu0 0.0
        %664 = vmatprep.subr.mxu0 0.0
        %665 = vmatpush1.msra.mxu0 %v635
        %666 = vmatprep.subr.mxu0 0.0
        %667 = vmatpush1.msra.mxu0 %v634
        %668 = vmatprep.subr.mxu0 0.0
        %669 = vmatpush2.msra.mxu0 0.0
        %670 = vmatprep.subr.mxu0 0.0
        %671 = vmatpush2.msra.mxu0 0.0
        %672 = vmatprep.subr.mxu0 0.0
        %673 = vmatpush2.msra.mxu0 0.0
        %674 = vmatprep.subr.mxu0 0.0
        %675 = vmatpush2.msra.mxu0 0.0
        %676 = vmatprep.subr.mxu0 0.0
        %677 = vmatpush2.msra.mxu0 0.0
        %678 = vmatprep.subr.mxu0 0.0
        %679 = vmatpush2.msra.mxu0 0.0
        %680 = vmatprep.subr.mxu0 0.0
        %681 = vmatpush2.msra.mxu0 0.0
        %682 = vmatprep.subr.mxu0 0.0
        %683 = vmatpush2.msra.mxu0 0.0
        %684 = vmatprep.subr.mxu0 0.0
        %685 = vmatpush2.msra.mxu0 0.0
        %686 = vmatprep.subr.mxu0 0.0
        %687 = vmatpush2.msra.mxu0 0.0
        %688 = vmatprep.subr.mxu0 0.0
        %689 = vmatpush2.msra.mxu0 0.0
        %690 = vmatprep.subr.mxu0 0.0
        %691 = vmatpush2.msra.mxu0 0.0
        %692 = vmatprep.subr.mxu0 0.0
        %693 = vmatpush2.msra.mxu0 0.0
        %694 = vmatprep.subr.mxu0 0.0
        %695 = vmatpush2.msra.mxu0 0.0
        %696 = vmatprep.subr.mxu0 0.0
        %697 = vmatpush2.msra.mxu0 0.0
        %698 = vmatprep.subr.mxu0 0.0
        %699 = vmatpush2.msra.mxu0 0.0
        %700 = vmatprep.mubr.f32.mxu0 0.0
        %701 = vmatmul.mubr.f32.gmra.mxu0 %v200
        %v702 = vpop.f32.mrf.mxu0
        %v703 = vadd.f32 0.0, %v702
        %v704 = vpop.f32.mrf.mxu0
        %705 = vmatprep.mubr.f32.mxu0 0.0
        %706 = vmatmul.mubr.f32.gmra.mxu0 %v203
        %v707 = vpop.f32.mrf.mxu0
        %v708 = vadd.f32 0.0, %v707
        %v709 = vpop.f32.mrf.mxu0
        %710 = vdwg.mxu0
        %v711 = vadd.f32 %v539, %v703
        %v712 = vadd.f32 %v540, %v708
        %v714 = vsel %vm198, %v711, 0
        %v717 = vsel %vm198, %v712, 0
        %719 = vmatprep.subr.mxu0 0.0
        %720 = vmatpush1.msra.mxu0 0.0
        %721 = vmatprep.subr.mxu0 0.0
        %722 = vmatpush1.msra.mxu0 0.0
        %723 = vmatprep.subr.mxu0 0.0
        %724 = vmatpush1.msra.mxu0 0.0
        %725 = vmatprep.subr.mxu0 0.0
        %726 = vmatpush1.msra.mxu0 0.0
        %727 = vmatprep.subr.mxu0 0.0
        %728 = vmatpush1.msra.mxu0 0.0
        %729 = vmatprep.subr.mxu0 0.0
        %730 = vmatpush1.msra.mxu0 0.0
        %731 = vmatprep.subr.mxu0 0.0
        %732 = vmatpush1.msra.mxu0 0.0
        %733 = vmatprep.subr.mxu0 0.0
        %734 = vmatpush1.msra.mxu0 0.0
        %735 = vmatprep.subr.mxu0 0.0
        %736 = vmatpush1.msra.mxu0 0.0
        %737 = vmatprep.subr.mxu0 0.0
        %738 = vmatpush1.msra.mxu0 0.0
        %739 = vmatprep.subr.mxu0 0.0
        %740 = vmatpush1.msra.mxu0 0.0
        %741 = vmatprep.subr.mxu0 0.0
        %742 = vmatpush1.msra.mxu0 0.0
        %743 = vmatprep.subr.mxu0 0.0
        %744 = vmatpush1.msra.mxu0 0.0
        %745 = vmatprep.subr.mxu0 0.0
        %746 = vmatpush1.msra.mxu0 0.0
        %747 = vmatprep.subr.mxu0 0.0
        %748 = vmatpush1.msra.mxu0 %v712
        %749 = vmatprep.subr.mxu0 0.0
        %750 = vmatpush1.msra.mxu0 %v711
        %751 = vmatprep.subr.mxu0 0.0
        %752 = vmatpush2.msra.mxu0 0.0
        %753 = vmatprep.subr.mxu0 0.0
        %754 = vmatpush2.msra.mxu0 0.0
        %755 = vmatprep.subr.mxu0 0.0
        %756 = vmatpush2.msra.mxu0 0.0
        %757 = vmatprep.subr.mxu0 0.0
        %758 = vmatpush2.msra.mxu0 0.0
        %759 = vmatprep.subr.mxu0 0.0
        %760 = vmatpush2.msra.mxu0 0.0
        %761 = vmatprep.subr.mxu0 0.0
        %762 = vmatpush2.msra.mxu0 0.0
        %763 = vmatprep.subr.mxu0 0.0
        %764 = vmatpush2.msra.mxu0 0.0
        %765 = vmatprep.subr.mxu0 0.0
        %766 = vmatpush2.msra.mxu0 0.0
        %767 = vmatprep.subr.mxu0 0.0
        %768 = vmatpush2.msra.mxu0 0.0
        %769 = vmatprep.subr.mxu0 0.0
        %770 = vmatpush2.msra.mxu0 0.0
        %771 = vmatprep.subr.mxu0 0.0
        %772 = vmatpush2.msra.mxu0 0.0
        %773 = vmatprep.subr.mxu0 0.0
        %774 = vmatpush2.msra.mxu0 0.0
        %775 = vmatprep.subr.mxu0 0.0
        %776 = vmatpush2.msra.mxu0 0.0
        %777 = vmatprep.subr.mxu0 0.0
        %778 = vmatpush2.msra.mxu0 0.0
        %779 = vmatprep.subr.mxu0 0.0
        %780 = vmatpush2.msra.mxu0 0.0
        %781 = vmatprep.subr.mxu0 0.0
        %782 = vmatpush2.msra.mxu0 0.0
        %783 = vmatprep.mubr.f32.mxu0 0.0
        %784 = vmatmul.mubr.f32.gmra.mxu0 %v714
        %v785 = vpop.f32.mrf.mxu0
        %v786 = vadd.f32 0.0, %v785
        %v787 = vpop.f32.mrf.mxu0
        %788 = vmatprep.mubr.f32.mxu0 0.0
        %789 = vmatmul.mubr.f32.gmra.mxu0 %v717
        %v790 = vpop.f32.mrf.mxu0
        %v791 = vadd.f32 0.0, %v790
        %v792 = vpop.f32.mrf.mxu0
        %793 = vdwg.mxu0
        %v795 = vsel %vm198, %v786, 0
        %v798 = vsel %vm198, %v791, 0
        %800 = vmatprep.subr.mxu0 0.0
        %801 = vmatpush1.msra.mxu0 0.0
        %802 = vmatprep.subr.mxu0 0.0
        %803 = vmatpush1.msra.mxu0 0.0
        %804 = vmatprep.subr.mxu0 0.0
        %805 = vmatpush1.msra.mxu0 0.0
        %806 = vmatprep.subr.mxu0 0.0
        %807 = vmatpush1.msra.mxu0 0.0
        %808 = vmatprep.subr.mxu0 0.0
        %809 = vmatpush1.msra.mxu0 0.0
        %810 = vmatprep.subr.mxu0 0.0
        %811 = vmatpush1.msra.mxu0 0.0
        %812 = vmatprep.subr.mxu0 0.0
        %813 = vmatpush1.msra.mxu0 0.0
        %814 = vmatprep.subr.mxu0 0.0
        %815 = vmatpush1.msra.mxu0 0.0
        %816 = vmatprep.subr.mxu0 0.0
        %817 = vmatpush1.msra.mxu0 0.0
        %818 = vmatprep.subr.mxu0 0.0
        %819 = vmatpush1.msra.mxu0 0.0
        %820 = vmatprep.subr.mxu0 0.0
        %821 = vmatpush1.msra.mxu0 0.0
        %822 = vmatprep.subr.mxu0 0.0
        %823 = vmatpush1.msra.mxu0 0.0
        %824 = vmatprep.subr.mxu0 0.0
        %825 = vmatpush1.msra.mxu0 0.0
        %826 = vmatprep.subr.mxu0 0.0
        %827 = vmatpush1.msra.mxu0 0.0
        %828 = vmatprep.subr.mxu0 0.0
        %829 = vmatpush1.msra.mxu0 %v791
        %830 = vmatprep.subr.mxu0 0.0
        %831 = vmatpush1.msra.mxu0 %v786
        %832 = vmatprep.subr.mxu0 0.0
        %833 = vmatpush2.msra.mxu0 0.0
        %834 = vmatprep.subr.mxu0 0.0
        %835 = vmatpush2.msra.mxu0 0.0
        %836 = vmatprep.subr.mxu0 0.0
        %837 = vmatpush2.msra.mxu0 0.0
        %838 = vmatprep.subr.mxu0 0.0
        %839 = vmatpush2.msra.mxu0 0.0
        %840 = vmatprep.subr.mxu0 0.0
        %841 = vmatpush2.msra.mxu0 0.0
        %842 = vmatprep.subr.mxu0 0.0
        %843 = vmatpush2.msra.mxu0 0.0
        %844 = vmatprep.subr.mxu0 0.0
        %845 = vmatpush2.msra.mxu0 0.0
        %846 = vmatprep.subr.mxu0 0.0
        %847 = vmatpush2.msra.mxu0 0.0
        %848 = vmatprep.subr.mxu0 0.0
        %849 = vmatpush2.msra.mxu0 0.0
        %850 = vmatprep.subr.mxu0 0.0
        %851 = vmatpush2.msra.mxu0 0.0
        %852 = vmatprep.subr.mxu0 0.0
        %853 = vmatpush2.msra.mxu0 0.0
        %854 = vmatprep.subr.mxu0 0.0
        %855 = vmatpush2.msra.mxu0 0.0
        %856 = vmatprep.subr.mxu0 0.0
        %857 = vmatpush2.msra.mxu0 0.0
        %858 = vmatprep.subr.mxu0 0.0
        %859 = vmatpush2.msra.mxu0 0.0
        %860 = vmatprep.subr.mxu0 0.0
        %861 = vmatpush2.msra.mxu0 0.0
        %862 = vmatprep.subr.mxu0 0.0
        %863 = vmatpush2.msra.mxu0 0.0
        %864 = vmatprep.mubr.f32.mxu0 0.0
        %865 = vmatmul.mubr.f32.gmra.mxu0 %v795
        %v866 = vpop.f32.mrf.mxu0
        %v867 = vadd.f32 0.0, %v866
        %v868 = vpop.f32.mrf.mxu0
        %869 = vmatprep.mubr.f32.mxu0 0.0
        %870 = vmatmul.mubr.f32.gmra.mxu0 %v798
        %v871 = vpop.f32.mrf.mxu0
        %v872 = vadd.f32 0.0, %v871
        %v873 = vpop.f32.mrf.mxu0
        %874 = vdwg.mxu0
        %v875 = vld [vmem:[#allocation9] sm:$0xff]
        %v876 = vld [vmem:[#allocation9 + $0x8] sm:$0xff]
        %v878 = vsel %vm198, %v867, 0
        %v881 = vsel %vm198, %v872, 0
        %883 = vmatprep.subr.mxu0 0.0
        %884 = vmatpush1.msra.mxu0 0.0
        %885 = vmatprep.subr.mxu0 0.0
        %886 = vmatpush1.msra.mxu0 0.0
        %887 = vmatprep.subr.mxu0 0.0
        %888 = vmatpush1.msra.mxu0 0.0
        %889 = vmatprep.subr.mxu0 0.0
        %890 = vmatpush1.msra.mxu0 0.0
        %891 = vmatprep.subr.mxu0 0.0
        %892 = vmatpush1.msra.mxu0 0.0
        %893 = vmatprep.subr.mxu0 0.0
        %894 = vmatpush1.msra.mxu0 0.0
        %895 = vmatprep.subr.mxu0 0.0
        %896 = vmatpush1.msra.mxu0 0.0
        %897 = vmatprep.subr.mxu0 0.0
        %898 = vmatpush1.msra.mxu0 0.0
        %899 = vmatprep.subr.mxu0 0.0
        %900 = vmatpush1.msra.mxu0 0.0
        %901 = vmatprep.subr.mxu0 0.0
        %902 = vmatpush1.msra.mxu0 0.0
        %903 = vmatprep.subr.mxu0 0.0
        %904 = vmatpush1.msra.mxu0 0.0
        %905 = vmatprep.subr.mxu0 0.0
        %906 = vmatpush1.msra.mxu0 0.0
        %907 = vmatprep.subr.mxu0 0.0
        %908 = vmatpush1.msra.mxu0 0.0
        %909 = vmatprep.subr.mxu0 0.0
        %910 = vmatpush1.msra.mxu0 0.0
        %911 = vmatprep.subr.mxu0 0.0
        %912 = vmatpush1.msra.mxu0 %v876
        %913 = vmatprep.subr.mxu0 0.0
        %914 = vmatpush1.msra.mxu0 %v875
        %915 = vmatprep.subr.mxu0 0.0
        %916 = vmatpush2.msra.mxu0 0.0
        %917 = vmatprep.subr.mxu0 0.0
        %918 = vmatpush2.msra.mxu0 0.0
        %919 = vmatprep.subr.mxu0 0.0
        %920 = vmatpush2.msra.mxu0 0.0
        %921 = vmatprep.subr.mxu0 0.0
        %922 = vmatpush2.msra.mxu0 0.0
        %923 = vmatprep.subr.mxu0 0.0
        %924 = vmatpush2.msra.mxu0 0.0
        %925 = vmatprep.subr.mxu0 0.0
        %926 = vmatpush2.msra.mxu0 0.0
        %927 = vmatprep.subr.mxu0 0.0
        %928 = vmatpush2.msra.mxu0 0.0
        %929 = vmatprep.subr.mxu0 0.0
        %930 = vmatpush2.msra.mxu0 0.0
        %931 = vmatprep.subr.mxu0 0.0
        %932 = vmatpush2.msra.mxu0 0.0
        %933 = vmatprep.subr.mxu0 0.0
        %934 = vmatpush2.msra.mxu0 0.0
        %935 = vmatprep.subr.mxu0 0.0
        %936 = vmatpush2.msra.mxu0 0.0
        %937 = vmatprep.subr.mxu0 0.0
        %938 = vmatpush2.msra.mxu0 0.0
        %939 = vmatprep.subr.mxu0 0.0
        %940 = vmatpush2.msra.mxu0 0.0
        %941 = vmatprep.subr.mxu0 0.0
        %942 = vmatpush2.msra.mxu0 0.0
        %943 = vmatprep.subr.mxu0 0.0
        %944 = vmatpush2.msra.mxu0 0.0
        %945 = vmatprep.subr.mxu0 0.0
        %946 = vmatpush2.msra.mxu0 0.0
        %947 = vmatprep.mubr.f32.mxu0 0.0
        %948 = vmatmul.mubr.f32.gmra.mxu0 %v878
        %v949 = vpop.f32.mrf.mxu0
        %v950 = vadd.f32 0.0, %v949
        %v951 = vpop.f32.mrf.mxu0
        %952 = vmatprep.mubr.f32.mxu0 0.0
        %953 = vmatmul.mubr.f32.gmra.mxu0 %v881
        %v954 = vpop.f32.mrf.mxu0
        %v955 = vadd.f32 0.0, %v954
        %v956 = vpop.f32.mrf.mxu0
        %957 = vdwg.mxu0
        %v959 = vsel %vm198, %v950, 0
        %v962 = vsel %vm198, %v955, 0
        %964 = vmatprep.subr.mxu0 0.0
        %965 = vmatpush1.xpose.msra.mxu0 0.0
        %966 = vmatprep.subr.mxu0 0.0
        %967 = vmatpush1.xpose.msra.mxu0 0.0
        %968 = vmatprep.subr.mxu0 0.0
        %969 = vmatpush1.xpose.msra.mxu0 0.0
        %970 = vmatprep.subr.mxu0 0.0
        %971 = vmatpush1.xpose.msra.mxu0 0.0
        %972 = vmatprep.subr.mxu0 0.0
        %973 = vmatpush1.xpose.msra.mxu0 0.0
        %974 = vmatprep.subr.mxu0 0.0
        %975 = vmatpush1.xpose.msra.mxu0 0.0
        %976 = vmatprep.subr.mxu0 0.0
        %977 = vmatpush1.xpose.msra.mxu0 0.0
        %978 = vmatprep.subr.mxu0 0.0
        %979 = vmatpush1.xpose.msra.mxu0 0.0
        %980 = vmatprep.subr.mxu0 0.0
        %981 = vmatpush1.xpose.msra.mxu0 0.0
        %982 = vmatprep.subr.mxu0 0.0
        %983 = vmatpush1.xpose.msra.mxu0 0.0
        %984 = vmatprep.subr.mxu0 0.0
        %985 = vmatpush1.xpose.msra.mxu0 0.0
        %986 = vmatprep.subr.mxu0 0.0
        %987 = vmatpush1.xpose.msra.mxu0 0.0
        %988 = vmatprep.subr.mxu0 0.0
        %989 = vmatpush1.xpose.msra.mxu0 0.0
        %990 = vmatprep.subr.mxu0 0.0
        %991 = vmatpush1.xpose.msra.mxu0 0.0
        %992 = vmatprep.subr.mxu0 0.0
        %993 = vmatpush1.xpose.msra.mxu0 %v881
        %994 = vmatprep.subr.mxu0 0.0
        %995 = vmatpush1.xpose.msra.mxu0 %v878
        %996 = vmatprep.subr.mxu0 0.0
        %997 = vmatpush2.xpose.msra.mxu0 0.0
        %998 = vmatprep.subr.mxu0 0.0
        %999 = vmatpush2.xpose.msra.mxu0 0.0
        %1000 = vmatprep.subr.mxu0 0.0
        %1001 = vmatpush2.xpose.msra.mxu0 0.0
        %1002 = vmatprep.subr.mxu0 0.0
        %1003 = vmatpush2.xpose.msra.mxu0 0.0
        %1004 = vmatprep.subr.mxu0 0.0
        %1005 = vmatpush2.xpose.msra.mxu0 0.0
        %1006 = vmatprep.subr.mxu0 0.0
        %1007 = vmatpush2.xpose.msra.mxu0 0.0
        %1008 = vmatprep.subr.mxu0 0.0
        %1009 = vmatpush2.xpose.msra.mxu0 0.0
        %1010 = vmatprep.subr.mxu0 0.0
        %1011 = vmatpush2.xpose.msra.mxu0 0.0
        %1012 = vmatprep.subr.mxu0 0.0
        %1013 = vmatpush2.xpose.msra.mxu0 0.0
        %1014 = vmatprep.subr.mxu0 0.0
        %1015 = vmatpush2.xpose.msra.mxu0 0.0
        %1016 = vmatprep.subr.mxu0 0.0
        %1017 = vmatpush2.xpose.msra.mxu0 0.0
        %1018 = vmatprep.subr.mxu0 0.0
        %1019 = vmatpush2.xpose.msra.mxu0 0.0
        %1020 = vmatprep.subr.mxu0 0.0
        %1021 = vmatpush2.xpose.msra.mxu0 0.0
        %1022 = vmatprep.subr.mxu0 0.0
        %1023 = vmatpush2.xpose.msra.mxu0 0.0
        %1024 = vmatprep.subr.mxu0 0.0
        %1025 = vmatpush2.xpose.msra.mxu0 0.0
        %1026 = vmatprep.subr.mxu0 0.0
        %1027 = vmatpush2.xpose.msra.mxu0 0.0
        %1028 = vmatprep.mubr.f32.mxu0 0.0
        %1029 = vmatmul.mubr.f32.gmra.mxu0 %v959
        %v1030 = vpop.f32.mrf.mxu0
        %v1031 = vadd.f32 0.0, %v1030
        %v1032 = vpop.f32.mrf.mxu0
        %1033 = vmatprep.mubr.f32.mxu0 0.0
        %1034 = vmatmul.mubr.f32.gmra.mxu0 %v962
        %v1035 = vpop.f32.mrf.mxu0
        %v1036 = vadd.f32 0.0, %v1035
        %v1037 = vpop.f32.mrf.mxu0
        %1038 = vdwg.mxu0
        %1039 = vst.msk [vmem:[#allocation9] sm:$0xff] %vm198, %v1031
        %1040 = vst.msk [vmem:[#allocation9 + $0x8] sm:$0xff] %vm198, %v1036
        // Predicated region
        $region41: #{tpu_custom_call.1} parent=27 // pred_check
          %p1041 = pneg %p83
        $region42: #{tpu_custom_call.1} parent=27 // pred_check_branch
          %1043 = sbr.rel (%p1041) target = $region44
        $region43: #{tpu_custom_call.1} parent=27 // pred_region
          %s1045 = ssub.s32 256, 256
          %1046 = vsyncadd [#allocation6], %s1045
          %s1047 = sshll.u32 [#allocation9], 4
          %s1048 = int_to_ptr.vmem [resolvable:$true] %s1047
          %1053 = dma.vmem_to_hbm [thread:$0]  %s1048, 256, %s3, [#allocation6], 128, 128, 8
        $region44: #{tpu_custom_call.1} parent=27 // pred_fallthru
          _
        // Predicated region
        $region45: #{tpu_custom_call.1} parent=27 // pred_check
          %p1054 = pneg %p83
        $region46: #{tpu_custom_call.1} parent=27 // pred_check_branch
          %1056 = sbr.rel (%p1054) target = $region48
        $region47: #{tpu_custom_call.1} parent=27 // pred_region
          %1057 = dma.done [#allocation6], 256
        $region48: #{tpu_custom_call.1} parent=27 // pred_fallthru
          _
      $region28: #{tpu_custom_call.1} parent=5 // pred_fallthru
        _
      %p1058 = scmp.le.s32.totalorder 2, %s18
      // Predicated region
      $region49: #{tpu_custom_call.1} parent=5 // pred_check
        %p1059 = pneg %p1058
      $region50: #{tpu_custom_call.1} parent=5 // pred_check_branch
        %1061 = sbr.rel (%p1059) target = $region52
      $region51: #{tpu_custom_call.1} parent=5 // pred_region
        %s1062 = ssub.s32 %s18, 2
      $region52: #{tpu_custom_call.1} parent=5 // pred_fallthru
        _
    $region6: #{tpu_custom_call.1} parent=1 // loop_footer
      %s22 = sadd.s32 1, %s18
    $region7: #{tpu_custom_call.1} parent=1 // loop_footer_branch
      %17 = sbr.rel target = $region3
    $region8: #{tpu_custom_call.1} parent=1 // loop_exit
      _
    %1063 = vsyncpa [#allocation5], 1
    %s1064 = scalar_lea.sflag [#allocation5], 1
    %1065 = vsyncpa %s1064, 1
    %1066 = vsyncpa [#allocation8], 1
    %1067 = vsyncpa [#allocation6], 1
    %s1068 = scalar_lea.sflag [#allocation6], 1
    %1069 = vsyncpa %s1068, 1

</llo_original>
